<compile_context>
chip_gen: v5e
topology: v5e:2x2
jax: 0.10.0
libtpu: 0.0.40
codegen_flags: <defaults>
</compile_context>

<pallas_src>
import functools

import jax
import jax.numpy as jnp
from jax.experimental import pallas as pl
from jax.experimental.pallas import tpu as pltpu


# ------------------------------------------------------------- bilinear -----

def _bilinear_coords(out_size, in_size):
    """Source taps / weights matching F.interpolate('bilinear', align_corners=False)."""
    scale = in_size / out_size
    src = (jnp.arange(out_size, dtype=jnp.float32) + 0.5) * scale - 0.5
    src = jnp.maximum(src, 0.0)
    i0 = jnp.minimum(jnp.floor(src).astype(jnp.int32), in_size - 1)
    i1 = jnp.minimum(i0 + 1, in_size - 1)
    frac = src - i0.astype(jnp.float32)
    return i0, i1, frac


def _bilinear_matrix(out_size, in_size):
    """Dense (out_size, in_size) interpolation matrix (2 taps per row)."""
    i0, i1, frac = _bilinear_coords(out_size, in_size)
    m0 = jax.nn.one_hot(i0, in_size, dtype=jnp.float32) * (1.0 - frac)[:, None]
    m1 = jax.nn.one_hot(i1, in_size, dtype=jnp.float32) * frac[:, None]
    return m0 + m1


# --------------------------------------------------------------- kernels ----

def _conv_softmax_kernel(x_ref, w_ref, b_ref, o_ref, *, log):
    """Fused 1x1 conv (MXU matmul) + bias + channel (log_)softmax (no resize).

    x_ref: (1, Cin, LB)   pixels on the lane axis
    w_ref: (Cout, Cin)    f32
    b_ref: (Cout, 1)      f32
    o_ref: (1, Cout, LB)
    """
    x = x_ref[0].astype(jnp.float32)                          # (Cin, LB)
    w = w_ref[...]                                            # (Cout, Cin)
    b = b_ref[...]                                            # (Cout, 1)

    # 1x1 conv: one MXU matmul, pixels stay lane-dense.
    y = jnp.dot(w, x, preferred_element_type=jnp.float32) + b  # (Cout, LB)

    # (log_)softmax over the channel (sublane) axis via XLU reductions.
    m = jnp.max(y, axis=0, keepdims=True)                     # (1, LB)
    e = jnp.exp(y - m)
    s = jnp.sum(e, axis=0, keepdims=True)                     # (1, LB)
    if log:
        out = (y - m) - jnp.log(s)
    else:
        out = e * pl.reciprocal(s, approx=True)
    o_ref[0] = out.astype(o_ref.dtype)


def _conv_resize_softmax_kernel(x_ref, ry_ref, rxt_ref, w_ref, b_ref, o_ref,
                                acc_ref, *, log):
    """Fused 1x1 conv + separable bilinear resize + channel (log_)softmax.

    x_ref:   (1, Cin, H, W)   VMEM (same block for all row tiles -> DMA'd once per n)
    ry_ref:  (TSH, H)         VMEM, vertical interpolation weights for this tile
    rxt_ref: (W, SW)          VMEM, horizontal interpolation weights (transposed)
    w_ref:   (Cout, Cin)      SMEM (scalar reads)
    b_ref:   (Cout,)          SMEM
    o_ref:   (1, Cout, TSH, SW)
    acc_ref: (Cout, H, W)     VMEM f32 scratch: conv output, computed at t==0 only
    """
    cin = x_ref.shape[1]
    cout = o_ref.shape[1]

    # --- 1x1 conv at input resolution, once per batch element (t == 0) ------
    # SMEM-scalar broadcast FMAs: keeps (H, W) spatial layout for the resize
    # matmuls without any in-kernel reshape; cost is tiny vs. the resize.
    @pl.when(pl.program_id(1) == 0)
    def _():
        for c in range(cout):
            yc = jnp.full(acc_ref.shape[1:], b_ref[c], dtype=jnp.float32)
            for k in range(cin):
                yc = yc + x_ref[0, k, :, :].astype(jnp.float32) * w_ref[c, k]
            acc_ref[c] = yc

    ry = ry_ref[...]                                          # (TSH, H)
    rxt = rxt_ref[...]                                        # (W, SW)

    # --- separable bilinear resize on the MXU: out_c = Ry @ y_c @ Rx^T ------
    pre = []
    for c in range(cout):
        t = jnp.dot(ry, acc_ref[c], preferred_element_type=jnp.float32)      # (TSH, W)
        pre.append(jnp.dot(t, rxt, preferred_element_type=jnp.float32))      # (TSH, SW)

    # --- channel (log_)softmax (pure elementwise VPU over the channel list) -
    m = pre[0]
    for c in range(1, cout):
        m = jnp.maximum(m, pre[c])
    e = [jnp.exp(p - m) for p in pre]
    s = e[0]
    for c in range(1, cout):
        s = s + e[c]
    if log:
        ls = jnp.log(s)
        for c in range(cout):
            o_ref[0, c] = ((pre[c] - m) - ls).astype(o_ref.dtype)
    else:
        r = pl.reciprocal(s, approx=True)
        for c in range(cout):
            o_ref[0, c] = (e[c] * r).astype(o_ref.dtype)


# --------------------------------------------------------------- wrappers ---

def _choose_lane_block(hw, cin, cout, target=8192, vmem_budget=16 * 1024 * 1024):
    """Lane block: as large as possible (amortizes per-step overhead), multiple
    of 128 (or full extent), and the double-buffered f32 in+out tiles must fit
    comfortably inside the default scoped-VMEM limit."""
    if hw <= target:
        return hw                                   # full extent always legal
    per_pixel = 4 * 2 * (cin + cout)                # f32, double-buffered
    lb = min(target, max(512, (vmem_budget // per_pixel) // 128 * 128))
    return lb


def _conv_softmax(x, weight, bias, log, lane_target=8192):
    n, cin, h, w = x.shape
    cout = weight.shape[0]
    hw = h * w
    lb = _choose_lane_block(hw, cin, cout, lane_target)
    grid = (n, pl.cdiv(hw, lb))
    w_f32 = weight.astype(jnp.float32)                         # (Cout, Cin)
    b_col = bias.reshape(cout, 1).astype(jnp.float32)          # (Cout, 1)

    out = pl.pallas_call(
        functools.partial(_conv_softmax_kernel, log=log),
        out_shape=jax.ShapeDtypeStruct((n, cout, hw), x.dtype),
        grid_spec=pltpu.PrefetchScalarGridSpec(
            num_scalar_prefetch=0,
            grid=grid,
            in_specs=[
                pl.BlockSpec((1, cin, lb), lambda i, j: (i, 0, j)),
                pl.BlockSpec((cout, cin), lambda i, j: (0, 0)),
                pl.BlockSpec((cout, 1), lambda i, j: (0, 0)),
            ],
            out_specs=pl.BlockSpec((1, cout, lb), lambda i, j: (i, 0, j)),
        ),
        compiler_params=pltpu.CompilerParams(
            dimension_semantics=("parallel", "parallel")),
    )(x.reshape(n, cin, hw), w_f32, b_col)
    return out.reshape(n, cout, h, w)


def _conv_resize_softmax(x, weight, bias, out_h, out_w, log, row_tile=128):
    n, cin, h, w = x.shape
    cout = weight.shape[0]
    ry = _bilinear_matrix(out_h, h)              # (SH, H)
    rxt = _bilinear_matrix(out_w, w).T           # (W, SW)
    tsh = out_h if out_h <= row_tile else row_tile
    grid = (n, pl.cdiv(out_h, tsh))

    out = pl.pallas_call(
        functools.partial(_conv_resize_softmax_kernel, log=log),
        out_shape=jax.ShapeDtypeStruct((n, cout, out_h, out_w), x.dtype),
        grid_spec=pltpu.PrefetchScalarGridSpec(
            num_scalar_prefetch=0,
            grid=grid,
            in_specs=[
                pl.BlockSpec((1, cin, h, w), lambda i, t: (i, 0, 0, 0)),
                pl.BlockSpec((tsh, h), lambda i, t: (t, 0)),
                pl.BlockSpec((w, out_w), lambda i, t: (0, 0)),
                pl.BlockSpec(memory_space=pltpu.MemorySpace.SMEM),   # weight
                pl.BlockSpec(memory_space=pltpu.MemorySpace.SMEM),   # bias
            ],
            out_specs=pl.BlockSpec((1, cout, tsh, out_w),
                                   lambda i, t: (i, 0, t, 0)),
            scratch_shapes=[pltpu.VMEM((cout, h, w), jnp.float32)],
        ),
        compiler_params=pltpu.CompilerParams(
            # Row-tile axis carries the per-batch conv scratch -> "arbitrary".
            dimension_semantics=("parallel", "arbitrary")),
    )(x, ry, rxt, weight.astype(jnp.float32), bias.astype(jnp.float32))
    return out


@functools.partial(jax.jit, static_argnames=("seg_size", "use_softmax"))
def ssformer_ss_head(x, weight, bias, seg_size, use_softmax):
    """Forward pass of SSformerSSHead.

    x:      (N, in_dim, H, W)
    weight: (num_class, in_dim)   == conv_last.weight[:, :, 0, 0]
    bias:   (num_class,)          == conv_last.bias
    Returns (N, num_class, segH, segW): softmax if use_softmax else log_softmax
    over the class axis.
    """
    _, _, h, w = x.shape
    sh, sw = int(seg_size[0]), int(seg_size[1])
    log = not use_softmax
    if (h, w) == (sh, sw):
        return _conv_softmax(x, weight, bias, log)
    return _conv_resize_softmax(x, weight, bias, sh, sw, log)


# ------------------------------------------------------- pure-JAX reference --

def _ref_bilinear_nchw(x, out_h, out_w):
    _, _, h, w = x.shape
    y0, y1, fy = _bilinear_coords(out_h, h)
    x0, x1, fx = _bilinear_coords(out_w, w)
    fy = fy[None, None, :, None]
    fx = fx[None, None, None, :]
    top = x[:, :, y0, :] * (1.0 - fy) + x[:, :, y1, :] * fy
    return top[:, :, :, x0] * (1.0 - fx) + top[:, :, :, x1] * fx


def _ref_head(x, weight, bias, seg_size, use_softmax):
    y = jnp.einsum("ck,nkhw->nchw", weight, x,
                   precision=jax.lax.Precision.HIGHEST)
    y = y + bias[None, :, None, None]
    if (y.shape[2], y.shape[3]) != tuple(seg_size):
        y = _ref_bilinear_nchw(y, seg_size[0], seg_size[1])
    return jax.nn.softmax(y, axis=1) if use_softmax else jax.nn.log_softmax(y, axis=1)


# ------------------------------------------------------------------- main ----

if __name__ == "__main__":
    key = jax.random.PRNGKey(0)
    k_x, k_w, k_b = jax.random.split(key, 3)

    N, IN_DIM, H, W = 2, 8, 16, 16
    NUM_CLASS = 5
    SEG = (32, 32)

    x = jax.random.normal(k_x, (N, IN_DIM, H, W), dtype=jnp.float32)
    weight = jax.random.normal(k_w, (NUM_CLASS, IN_DIM), dtype=jnp.float32) * 0.1
    bias = jax.random.normal(k_b, (NUM_CLASS,), dtype=jnp.float32) * 0.1

    def max_abs_diff(a, b):
        return float(jnp.max(jnp.abs(a - b)))

    # 1) No resize, log_softmax.
    out = jax.block_until_ready(
        ssformer_ss_head(x, weight, bias, seg_size=(H, W), use_softmax=False))
    ref = _ref_head(x, weight, bias, (H, W), False)
    assert out.shape == (N, NUM_CLASS, H, W)
    assert max_abs_diff(out, ref) < 1e-3, max_abs_diff(out, ref)

    # 2) No resize, softmax (approx reciprocal on EUP -> looser tolerance).
    out = jax.block_until_ready(
        ssformer_ss_head(x, weight, bias, seg_size=(H, W), use_softmax=True))
    ref = _ref_head(x, weight, bias, (H, W), True)
    assert max_abs_diff(out, ref) < 1e-2, max_abs_diff(out, ref)

    # 3) Bilinear upsample to (32, 32), log_softmax.
    out = jax.block_until_ready(
        ssformer_ss_head(x, weight, bias, seg_size=SEG, use_softmax=False))
    ref = _ref_head(x, weight, bias, SEG, False)
    assert out.shape == (N, NUM_CLASS, SEG[0], SEG[1])
    assert max_abs_diff(out, ref) < 2e-2, max_abs_diff(out, ref)

    # 4) Bilinear upsample to (32, 32), softmax; class probabilities sum to 1.
    out = jax.block_until_ready(
        ssformer_ss_head(x, weight, bias, seg_size=SEG, use_softmax=True))
    ref = _ref_head(x, weight, bias, SEG, True)
    assert max_abs_diff(out, ref) < 2e-2, max_abs_diff(out, ref)
    sums = jnp.sum(out, axis=1)
    assert float(jnp.max(jnp.abs(sums - 1.0))) < 1e-2

    print("KERNEL_OK")
</pallas_src>

<mosaic_0001>
module attributes {stable_mosaic.version = 11 : i64} {
  func.func @_conv_softmax_kernel(%arg0: i32, %arg1: i32, %arg2: memref<1x8x256xf32, #tpu.memory_space<vmem>>, %arg3: memref<5x8xf32, #tpu.memory_space<vmem>>, %arg4: memref<5x1xf32, #tpu.memory_space<vmem>>, %arg5: memref<1x5x256xf32, #tpu.memory_space<vmem>>) attributes {dimension_semantics = [#tpu.dimension_semantics<parallel>, #tpu.dimension_semantics<parallel>], iteration_bounds = array<i64: 2, 1>, scalar_prefetch = 0 : i64, scratch_operands = 0 : i64, tpu.core_type = #tpu.core_type<tc>, window_params = [{transform_indices = @transform_0, window_bounds = array<i64: 1, 8, 256>}, {pipeline_mode = #tpu.pipeline_mode<synchronous>, transform_indices = @transform_1, window_bounds = array<i64: 5, 8>}, {pipeline_mode = #tpu.pipeline_mode<synchronous>, transform_indices = @transform_2, window_bounds = array<i64: 5, 1>}, {transform_indices = @transform_3, window_bounds = array<i64: 1, 5, 256>}]} {
    %c0 = arith.constant 0 : index
    %c0_0 = arith.constant 0 : index
    %c0_1 = arith.constant 0 : index
    %0 = vector.load %arg2[%c0, %c0_0, %c0_1] : memref<1x8x256xf32, #tpu.memory_space<vmem>>, vector<1x8x256xf32>
    %1 = vector.shape_cast %0 : vector<1x8x256xf32> to vector<8x256xf32>
    %c0_2 = arith.constant 0 : index
    %c0_3 = arith.constant 0 : index
    %2 = vector.load %arg3[%c0_2, %c0_3] : memref<5x8xf32, #tpu.memory_space<vmem>>, vector<5x8xf32>
    %c0_4 = arith.constant 0 : index
    %c0_5 = arith.constant 0 : index
    %3 = vector.load %arg4[%c0_4, %c0_5] : memref<5x1xf32, #tpu.memory_space<vmem>>, vector<5x1xf32>
    %cst = arith.constant dense<0.000000e+00> : vector<5x256xf32>
    %4 = tpu.matmul %2, %1, %cst {dimension_numbers = #tpu.dot_dimension_numbers<[1], [0], [0], [1], [0, 0, 1, 1], [], []>} : vector<5x8xf32>, vector<8x256xf32>, vector<5x256xf32> -> vector<5x256xf32>
    %5 = vector.broadcast %3 : vector<5x1xf32> to vector<5x256xf32>
    %6 = arith.addf %4, %5 : vector<5x256xf32>
    %cst_6 = arith.constant dense<0xFF800000> : vector<256xf32>
    %7 = vector.multi_reduction <maximumf>, %6, %cst_6 [0] : vector<5x256xf32> to vector<256xf32>
    %8 = vector.shape_cast %7 : vector<256xf32> to vector<1x256xf32>
    %9 = vector.broadcast %8 : vector<1x256xf32> to vector<5x256xf32>
    %10 = arith.subf %6, %9 : vector<5x256xf32>
    %11 = math.exp %10 : vector<5x256xf32>
    %cst_7 = arith.constant dense<0.000000e+00> : vector<256xf32>
    %12 = vector.multi_reduction <add>, %11, %cst_7 [0] : vector<5x256xf32> to vector<256xf32>
    %13 = vector.shape_cast %12 : vector<256xf32> to vector<1x256xf32>
    %14 = vector.broadcast %8 : vector<1x256xf32> to vector<5x256xf32>
    %15 = arith.subf %6, %14 : vector<5x256xf32>
    %16 = math.log %13 : vector<1x256xf32>
    %17 = vector.broadcast %16 : vector<1x256xf32> to vector<5x256xf32>
    %18 = arith.subf %15, %17 : vector<5x256xf32>
    %c0_8 = arith.constant 0 : index
    %c0_9 = arith.constant 0 : index
    %c0_10 = arith.constant 0 : index
    %19 = vector.load %arg5[%c0_8, %c0_9, %c0_10] : memref<1x5x256xf32, #tpu.memory_space<vmem>>, vector<1x5x256xf32>
    %20 = vector.shape_cast %19 : vector<1x5x256xf32> to vector<5x256xf32>
    %21 = vector.shape_cast %18 : vector<5x256xf32> to vector<1x5x256xf32>
    tpu.vector_store %arg5[%c0_8, %c0_9, %c0_10], %21 {strides = array<i32>} : memref<1x5x256xf32, #tpu.memory_space<vmem>>, vector<1x5x256xf32>,
    return
  }
  func.func @transform_0(%arg0: i32, %arg1: i32) -> (i32, i32, i32) {
    %c0_i32 = arith.constant 0 : i32
    %c0_i32_0 = arith.constant 0 : i32
    return %arg0, %c0_i32, %arg1 : i32, i32, i32
  }
  func.func @transform_1(%arg0: i32, %arg1: i32) -> (i32, i32) {
    %c0_i32 = arith.constant 0 : i32
    %c0_i32_0 = arith.constant 0 : i32
    %c0_i32_1 = arith.constant 0 : i32
    return %c0_i32, %c0_i32_0 : i32, i32
  }
  func.func @transform_2(%arg0: i32, %arg1: i32) -> (i32, i32) {
    %c0_i32 = arith.constant 0 : i32
    %c0_i32_0 = arith.constant 0 : i32
    %c0_i32_1 = arith.constant 0 : i32
    return %c0_i32, %c0_i32_0 : i32, i32
  }
  func.func @transform_3(%arg0: i32, %arg1: i32) -> (i32, i32, i32) {
    %c0_i32 = arith.constant 0 : i32
    %c0_i32_0 = arith.constant 0 : i32
    return %arg0, %c0_i32, %arg1 : i32, i32, i32
  }
}

</mosaic_0001>

<llo_original>
// kernel: ssformer_ss_head.1
$region0: #{ssformer_ss_head.1}
  #allocation0 [shape = 'u32[]', space=smem, size = 0x4, offset = 0x4, fixed_abs, tag = 'smem constant byte address 0x4 - core index']
  #allocation1 [shape = 'u32[72,128]{1,0:T(1,128)}', space=vmem, size = 0x9000, scoped, tag = 'internal scratch']
  %s0 = inlined_call_operand.vmem [shape: f32[2,8,256], index: 0, kind: input, shape index: {}]
  %s1 = inlined_call_operand.vmem [shape: f32[5,8], index: 1, kind: input, shape index: {}]
  %s2 = inlined_call_operand.vmem [shape: f32[5,1], index: 2, kind: input, shape index: {}]
  %s3 = inlined_call_operand.vmem [shape: f32[2,5,256], index: 3, kind: output, shape index: {}]
  %s4 = sld [smem:[#allocation0]]
  $region45: #{ssformer_ss_head.1} parent=0
    _
  %s6 = ssub.s32 1, %s4
  %s7 = scalar_select 0, %s6, %s4
  loop: start=0, step=1, limit=4
  $region2: #{ssformer_ss_head.1} parent=0 // loop_pre_header
    _
  $region3: #{ssformer_ss_head.1} parent=0 // loop_header
    %s9 = sphi 0, %s13
    %p10 = scmp.ge.s32.totalorder %s9, 4
    %s16 = sphi 0, %s28
    %s17 = sphi 0, %s24
    %s18 = sphi 0, %s16
    %s19 = sphi 0, %s17
    %s20 = sphi 0, %s18
    %s21 = sphi 0, %s19
    %s33 = sphi 0, %s35
    %s36 = sphi 0, %s33
    %s37 = sphi 0, %s36
    %s53 = sphi 0, %s37
    %s57 = sphi 0, %s57
    %s59 = sphi 0, %s57
    %s60 = sphi 0, %s59
    %s74 = sphi 0, %s60
    %s78 = sphi 0, %s78
    %s80 = sphi 0, %s78
    %s81 = sphi 0, %s80
    %s95 = sphi 0, %s81
    %s103 = sphi 0, %s105
    %s106 = sphi 0, %s103
    %s107 = sphi 0, %s106
    %s123 = sphi 0, %s107
  $region4: #{ssformer_ss_head.1} parent=0 // loop_header_branch
    %12 = sbr.rel (%p10) target = $region8
  $region5: #{ssformer_ss_head.1} parent=0 // loop_body
    %s14 = ssub.s32 %s9, 1
    %s15 = ssub.s32 %s9, 2
    %s22 = sadd.s32 1, %s17
    %p23 = scmp.ge.s32.totalorder %s22, 1
    %s24 = scalar_select %p23, 0, %s22
    %s25 = sadd.s32 1, %s16
    %s26 = scalar_select %p23, %s25, %s16
    %p27 = scmp.ge.s32.totalorder %s26, 2
    %s28 = scalar_select %p27, 0, %s26
    %s29 = ssub.s32 %s16, %s28
    %s30 = ssub.s32 %s17, %s24
    %s31 = sor.u32 %s29, %s30
    %p32 = scmp.eq.s32.totalorder %s31, 0
    %s34 = sadd.s32 %s33, 1
    %s35 = scalar_select %p32, %s33, %s34
    %p38 = pneg %p32
    %p39 = scmp.eq.s32.totalorder %s9, 1
    %p40 = por %p38, %p39
    %p41 = scmp.ne.s32.totalorder %s33, %s36
    %p42 = scmp.eq.s32.totalorder %s9, 0
    %p43 = por %p41, %p42
    %p44 = scmp.ne.s32.totalorder %s33, %s36
    %p45 = scmp.eq.s32.totalorder %s14, 1
    %p46 = por %p44, %p45
    %p47 = scmp.ne.s32.totalorder %s36, %s37
    %p48 = scmp.eq.s32.totalorder %s14, 0
    %p49 = por %p47, %p48
    %p50 = scmp.ne.s32.totalorder %s36, %s37
    %p51 = scmp.eq.s32.totalorder %s15, 1
    %p52 = por %p50, %p51
    %p54 = scmp.ne.s32.totalorder %s37, %s53
    %p55 = scmp.eq.s32.totalorder %s15, 0
    %p56 = por %p54, %p55
    %s58 = sadd.s32 %s57, 1
    %p61 = scmp.eq.s32.totalorder %s9, 1
    %p62 = scmp.ne.s32.totalorder %s57, %s59
    %p63 = scmp.eq.s32.totalorder %s9, 0
    %p64 = por %p62, %p63
    %p65 = scmp.ne.s32.totalorder %s57, %s59
    %p66 = scmp.eq.s32.totalorder %s14, 1
    %p67 = por %p65, %p66
    %p68 = scmp.ne.s32.totalorder %s59, %s60
    %p69 = scmp.eq.s32.totalorder %s14, 0
    %p70 = por %p68, %p69
    %p71 = scmp.ne.s32.totalorder %s59, %s60
    %p72 = scmp.eq.s32.totalorder %s15, 1
    %p73 = por %p71, %p72
    %p75 = scmp.ne.s32.totalorder %s60, %s74
    %p76 = scmp.eq.s32.totalorder %s15, 0
    %p77 = por %p75, %p76
    %s79 = sadd.s32 %s78, 1
    %p82 = scmp.eq.s32.totalorder %s9, 1
    %p83 = scmp.ne.s32.totalorder %s78, %s80
    %p84 = scmp.eq.s32.totalorder %s9, 0
    %p85 = por %p83, %p84
    %p86 = scmp.ne.s32.totalorder %s78, %s80
    %p87 = scmp.eq.s32.totalorder %s14, 1
    %p88 = por %p86, %p87
    %p89 = scmp.ne.s32.totalorder %s80, %s81
    %p90 = scmp.eq.s32.totalorder %s14, 0
    %p91 = por %p89, %p90
    %p92 = scmp.ne.s32.totalorder %s80, %s81
    %p93 = scmp.eq.s32.totalorder %s15, 1
    %p94 = por %p92, %p93
    %p96 = scmp.ne.s32.totalorder %s81, %s95
    %p97 = scmp.eq.s32.totalorder %s15, 0
    %p98 = por %p96, %p97
    %s99 = ssub.s32 %s16, %s28
    %s100 = ssub.s32 %s17, %s24
    %s101 = sor.u32 %s99, %s100
    %p102 = scmp.eq.s32.totalorder %s101, 0
    %s104 = sadd.s32 %s103, 1
    %s105 = scalar_select %p102, %s103, %s104
    %p108 = pneg %p102
    %p109 = scmp.eq.s32.totalorder %s9, 1
    %p110 = por %p108, %p109
    %p111 = scmp.ne.s32.totalorder %s103, %s106
    %p112 = scmp.eq.s32.totalorder %s9, 0
    %p113 = por %p111, %p112
    %p114 = scmp.ne.s32.totalorder %s103, %s106
    %p115 = scmp.eq.s32.totalorder %s14, 1
    %p116 = por %p114, %p115
    %p117 = scmp.ne.s32.totalorder %s106, %s107
    %p118 = scmp.eq.s32.totalorder %s14, 0
    %p119 = por %p117, %p118
    %p120 = scmp.ne.s32.totalorder %s106, %s107
    %p121 = scmp.eq.s32.totalorder %s15, 1
    %p122 = por %p120, %p121
    %p124 = scmp.ne.s32.totalorder %s107, %s123
    %p125 = scmp.eq.s32.totalorder %s15, 0
    %p126 = por %p124, %p125
    %p127 = scmp.le.s32.totalorder 1, %s9
    %p128 = scmp.lt.s32.totalorder %s9, 3
    %p129 = pnand %p127, %p128
    %p130 = pneg %p129
    // Predicated region
    $region9: #{ssformer_ss_head.1} parent=5 // pred_check
      _
    $region10: #{ssformer_ss_head.1} parent=5 // pred_check_branch
      %132 = sbr.rel (%p129) target = $region12
    $region11: #{ssformer_ss_head.1} parent=5 // pred_region
      %s133 = ssub.s32 %s9, 1
      // Predicated region
      $region13: #{ssformer_ss_head.1} parent=11 // pred_check
        %p134 = pneg %p70
      $region14: #{ssformer_ss_head.1} parent=11 // pred_check_branch
        %136 = sbr.rel (%p134) target = $region16
      $region15: #{ssformer_ss_head.1} parent=11 // pred_region
        _
      $region16: #{ssformer_ss_head.1} parent=11 // pred_fallthru
        _
      // Predicated region
      $region17: #{ssformer_ss_head.1} parent=11 // pred_check
        %p137 = pneg %p91
      $region18: #{ssformer_ss_head.1} parent=11 // pred_check_branch
        %139 = sbr.rel (%p137) target = $region20
      $region19: #{ssformer_ss_head.1} parent=11 // pred_region
        _
      $region20: #{ssformer_ss_head.1} parent=11 // pred_fallthru
        _
    $region12: #{ssformer_ss_head.1} parent=5 // pred_fallthru
      _
    %p140 = scmp.lt.s32.totalorder %s9, 2
    // Predicated region
    $region21: #{ssformer_ss_head.1} parent=5 // pred_check
      %p141 = pneg %p140
    $region22: #{ssformer_ss_head.1} parent=5 // pred_check_branch
      %143 = sbr.rel (%p141) target = $region24
    $region23: #{ssformer_ss_head.1} parent=5 // pred_region
      // Predicated region
      $region25: #{ssformer_ss_head.1} parent=23 // pred_check
        %p144 = pneg %p43
      $region26: #{ssformer_ss_head.1} parent=23 // pred_check_branch
        %146 = sbr.rel (%p144) target = $region28
      $region27: #{ssformer_ss_head.1} parent=23 // pred_region
        %s147 = smul.u32 2, %s17
        %p148 = scmp.lt.s32.totalorder %s16, 1
        %s149 = scalar_select %p148, %s16, 1
        %p150 = scmp.lt.s32.totalorder %s147, 1
        %s151 = scalar_select %p150, %s147, 1
        %s152 = smul.addr %s149, 2
        %s153 = sadd.s32 %s151, %s152
        %s154 = smul.addr %s153, 8
        %s155 = scalar_lea.vmem %s0, %s154
        %s156 = smul.u32 2, %s17
      $region28: #{ssformer_ss_head.1} parent=23 // pred_fallthru
        _
    $region24: #{ssformer_ss_head.1} parent=5 // pred_fallthru
      _
    %p157 = scmp.le.s32.totalorder 1, %s9
    %p158 = scmp.lt.s32.totalorder %s9, 3
    %p159 = pnand %p157, %p158
    %p160 = pneg %p159
    // Predicated region
    $region29: #{ssformer_ss_head.1} parent=5 // pred_check
      _
    $region30: #{ssformer_ss_head.1} parent=5 // pred_check_branch
      %162 = sbr.rel (%p159) target = $region32
    $region31: #{ssformer_ss_head.1} parent=5 // pred_region
      %s163 = ssub.s32 %s9, 1
      %s164 = smul.u32 2, %s19
      %p165 = scmp.lt.s32.totalorder %s18, 1
      %s166 = scalar_select %p165, %s18, 1
      %p167 = scmp.lt.s32.totalorder %s164, 1
      %s168 = scalar_select %p167, %s164, 1
      %s169 = smul.addr %s166, 2
      %s170 = sadd.s32 %s168, %s169
      %s171 = smul.addr %s170, 8
      %s172 = scalar_lea.vmem %s0, %s171
      %p173 = pneg %p49
      %p174 = pneg %p46
      %p175 = pneg %p70
      %p176 = pneg %p67
      %p177 = pneg %p91
      %p178 = pneg %p88
      %p179 = pneg %p119
      %p180 = pneg %p116
      %s181 = smul.u32 2, %s19
      %p182 = scmp.lt.s32.totalorder %s18, 1
      %s183 = scalar_select %p182, %s18, 1
      %p184 = scmp.lt.s32.totalorder %s181, 1
      %s185 = scalar_select %p184, %s181, 1
      %s186 = smul.addr %s183, 2
      %s187 = sadd.s32 %s185, %s186
      %s188 = smul.addr %s187, 8
      %s189 = scalar_lea.vmem %s3, %s188
      %s190 = smul.u32 2, %s19
      %p191 = scmp.lt.s32.totalorder %s18, 1
      %s192 = scalar_select %p191, %s18, 1
      %p193 = scmp.lt.s32.totalorder %s190, 1
      %s194 = scalar_select %p193, %s190, 1
      %s195 = smul.addr %s192, 2
      %s196 = sadd.s32 %s194, %s195
      %s197 = smul.addr %s196, 8
      %s198 = scalar_lea.vmem %s0, %s197
      %s199 = smul.u32 2, %s19
      %s200 = smul.u32 2, %s19
      %p201 = scmp.lt.s32.totalorder %s18, 1
      %s202 = scalar_select %p201, %s18, 1
      %p203 = scmp.lt.s32.totalorder %s200, 1
      %s204 = scalar_select %p203, %s200, 1
      %s205 = smul.addr %s202, 2
      %s206 = sadd.s32 %s204, %s205
      %s207 = smul.addr %s206, 8
      %s208 = scalar_lea.vmem %s3, %s207
      %s209 = smul.u32 2, %s19
      %v210 = vld [vmem:[%s198] sm:$0xff]
      %v211 = vld [vmem:[%s198 + $0x8] sm:$0xff]
      %v212 = vld [vmem:[%s1] sm:$0x1f]
      %v213 = vld [vmem:[%s2] sm:$0x1f]
      %215 = vset.pattern.permute.xlu0 0
      %216 = vperm.xlu0 %215, %v213
      %v217 = vpop.permute.xlu0 %216
      %vm219 = vcmask 64512
      %v221 = vsel %vm219, %v212, 0
      %223 = vmatpush.msra.mxu0 0.0
      %224 = vmatpush.msra.mxu0 0.0
      %225 = vmatpush.msra.mxu0 0.0
      %226 = vmatpush.msra.mxu0 0.0
      %227 = vmatpush.msra.mxu0 0.0
      %228 = vmatpush.msra.mxu0 0.0
      %229 = vmatpush.msra.mxu0 0.0
      %230 = vmatpush.msra.mxu0 0.0
      %231 = vmatpush.msra.mxu0 0.0
      %232 = vmatpush.msra.mxu0 0.0
      %233 = vmatpush.msra.mxu0 0.0
      %234 = vmatpush.msra.mxu0 0.0
      %235 = vmatpush.msra.mxu0 0.0
      %236 = vmatpush.msra.mxu0 0.0
      %237 = vmatpush.msra.mxu0 0.0
      %238 = vmatpush.msra.mxu0 %v210
      %239 = vmatmul.f32.gmra.mxu0 %v221
      %v240 = vpop.f32.mrf.mxu0
      %v241 = vadd.f32 %v217, %v240
      %242 = vdwg.mxu0
      %243 = vmatpush.msra.mxu0 0.0
      %244 = vmatpush.msra.mxu0 0.0
      %245 = vmatpush.msra.mxu0 0.0
      %246 = vmatpush.msra.mxu0 0.0
      %247 = vmatpush.msra.mxu0 0.0
      %248 = vmatpush.msra.mxu0 0.0
      %249 = vmatpush.msra.mxu0 0.0
      %250 = vmatpush.msra.mxu0 0.0
      %251 = vmatpush.msra.mxu0 0.0
      %252 = vmatpush.msra.mxu0 0.0
      %253 = vmatpush.msra.mxu0 0.0
      %254 = vmatpush.msra.mxu0 0.0
      %255 = vmatpush.msra.mxu0 0.0
      %256 = vmatpush.msra.mxu0 0.0
      %257 = vmatpush.msra.mxu0 0.0
      %258 = vmatpush.msra.mxu0 %v211
      %259 = vmatmul.f32.gmra.mxu0 %v221
      %v260 = vpop.f32.mrf.mxu0
      %v261 = vadd.f32 %v217, %v260
      %262 = vdwg.mxu0
      %vm263 = vcmask 1044480
      %v264 = vsel %vm263, %v241, -inf
      %v265 = vrot.slane %v264, 4
      %v266 = vmax.f32 %v264, %v265
      %v267 = vrot.slane %v266, 2
      %v268 = vmax.f32 %v266, %v267
      %v269 = vrot.slane %v268, 1
      %v270 = vmax.f32 %v268, %v269
      %v271 = vsel %vm263, %v261, -inf
      %v272 = vrot.slane %v271, 4
      %v273 = vmax.f32 %v271, %v272
      %v274 = vrot.slane %v273, 2
      %v275 = vmax.f32 %v273, %v274
      %v276 = vrot.slane %v275, 1
      %v277 = vmax.f32 %v275, %v276
      %v278 = vsub.f32 %v241, %v270
      %v279 = vsub.f32 %v261, %v277
      %v280 = vmul.f32 %v278, 1.442695
      %v281 = vpow.pop %v280
      %v282 = vmul.f32 %v279, 1.442695
      %v283 = vpow.pop %v282
      %v284 = vsel %vm263, %v281, 0.0
      %v285 = vrot.slane %v284, 4
      %v286 = vadd.f32 %v284, %v285
      %v287 = vrot.slane %v286, 2
      %v288 = vadd.f32 %v286, %v287
      %v289 = vrot.slane %v288, 1
      %v290 = vadd.f32 %v288, %v289
      %v291 = vsel %vm263, %v283, 0.0
      %v292 = vrot.slane %v291, 4
      %v293 = vadd.f32 %v291, %v292
      %v294 = vrot.slane %v293, 2
      %v295 = vadd.f32 %v293, %v294
      %v296 = vrot.slane %v295, 1
      %v297 = vadd.f32 %v295, %v296
      %v298 = vlog2.pop %v290
      %v299 = vmul.f32 %v298, 0.6931472
      %v300 = vlog2.pop %v297
      %v301 = vmul.f32 %v300, 0.6931472
      %v302 = vsub.f32 %v278, %v299
      %v303 = vsub.f32 %v279, %v301
      %304 = vst [vmem:[%s208] sm:$0x1f] %v302
      %305 = vst [vmem:[%s208 + $0x8] sm:$0x1f] %v303
      %s306 = smul.u32 2, %s19
      %p307 = scmp.lt.s32.totalorder %s18, 1
      %s308 = scalar_select %p307, %s18, 1
      %p309 = scmp.lt.s32.totalorder %s306, 1
      %s310 = scalar_select %p309, %s306, 1
      %s311 = smul.addr %s308, 2
      %s312 = sadd.s32 %s310, %s311
      %s313 = smul.addr %s312, 8
      %s314 = scalar_lea.vmem %s3, %s313
      // Predicated region
      $region33: #{ssformer_ss_head.1} parent=31 // pred_check
        %p315 = pneg %p116
      $region34: #{ssformer_ss_head.1} parent=31 // pred_check_branch
        %317 = sbr.rel (%p315) target = $region36
      $region35: #{ssformer_ss_head.1} parent=31 // pred_region
        %s318 = smul.u32 2, %s19
      $region36: #{ssformer_ss_head.1} parent=31 // pred_fallthru
        _
    $region32: #{ssformer_ss_head.1} parent=5 // pred_fallthru
      _
    %p319 = scmp.le.s32.totalorder 2, %s9
    // Predicated region
    $region37: #{ssformer_ss_head.1} parent=5 // pred_check
      %p320 = pneg %p319
    $region38: #{ssformer_ss_head.1} parent=5 // pred_check_branch
      %322 = sbr.rel (%p320) target = $region40
    $region39: #{ssformer_ss_head.1} parent=5 // pred_region
      %s323 = ssub.s32 %s9, 2
      // Predicated region
      $region41: #{ssformer_ss_head.1} parent=39 // pred_check
        %p324 = pneg %p122
      $region42: #{ssformer_ss_head.1} parent=39 // pred_check_branch
        %326 = sbr.rel (%p324) target = $region44
      $region43: #{ssformer_ss_head.1} parent=39 // pred_region
        %s327 = smul.u32 2, %s21
        %p328 = scmp.lt.s32.totalorder %s20, 1
        %s329 = scalar_select %p328, %s20, 1
        %p330 = scmp.lt.s32.totalorder %s327, 1
        %s331 = scalar_select %p330, %s327, 1
        %s332 = smul.addr %s329, 2
        %s333 = sadd.s32 %s331, %s332
        %s334 = smul.addr %s333, 8
        %s335 = scalar_lea.vmem %s3, %s334
      $region44: #{ssformer_ss_head.1} parent=39 // pred_fallthru
        _
    $region40: #{ssformer_ss_head.1} parent=5 // pred_fallthru
      _
  $region6: #{ssformer_ss_head.1} parent=0 // loop_footer
    %s13 = sadd.s32 1, %s9
  $region7: #{ssformer_ss_head.1} parent=0 // loop_footer_branch
    %8 = sbr.rel target = $region3
  $region8: #{ssformer_ss_head.1} parent=0 // loop_exit
    _

</llo_original>
